<compile_context>
chip_gen: v7x
topology: tpu7x:2x2x1
jax: 0.10.0
libtpu: 0.0.40
codegen_flags: <defaults>
</compile_context>

<pallas_src>
import jax
import jax.numpy as jnp
from jax.experimental import pallas as pl
from jax.experimental.pallas import tpu as pltpu


HIDDEN = 256  # FC1/FC2 width, fixed by the module definition.


# ----------------------------------------------------------------------------
# Kernel
# ----------------------------------------------------------------------------
def q_kernel(obs_ref, act_ref, w_of_ref, w_af_ref, w2_ref, vecs_ref, b3_ref,
             out_ref):
    """One batch tile: out[0, :] = Q(obs_tile, act_tile)."""
    vecs = vecs_ref[...]                    # (3, 256) f32 packed row-vectors
    b1f = vecs[0:1, :]                      # folded FC1 bias
    b2f = vecs[1:2, :]                      # FC2 bias
    w3r = vecs[2:3, :]                      # FC3 weight row (1, 256)
    b3 = b3_ref[0]                          # FC3 bias scalar (SMEM)

    # bf16 matmul inputs, f32 accumulation on the MXU.  If the caller already
    # supplies bf16, these casts are no-ops.
    obs = obs_ref[...].astype(jnp.bfloat16)         # (tb, d_obs)
    act = act_ref[...].astype(jnp.bfloat16)         # (tb, d_act)

    # Folded first stage: relu(obs @ (W_obs@W1_top) + act @ (W_act@W1_bot) + b)
    # (replaces obs_FC, action_FC, torch.cat and FC1 of the original module).
    h1 = jnp.dot(obs, w_of_ref[...], preferred_element_type=jnp.float32)
    h1 = h1 + jnp.dot(act, w_af_ref[...], preferred_element_type=jnp.float32)
    # Cast straight after the relu so all further traffic is bf16 (v5e note).
    h1 = jnp.maximum(h1 + b1f, 0.0).astype(jnp.bfloat16)       # (tb, 256)

    # FC2 -> relu, f32 accumulation.
    h2 = jnp.dot(h1, w2_ref[...], preferred_element_type=jnp.float32)
    h2 = jnp.maximum(h2 + b2f, 0.0)                             # (tb, 256) f32

    # FC3 (256 -> 1) over the whole tile as a single M=1 MXU dot with a
    # transposed rhs (same dimension_numbers pattern as the flash-attention
    # q.k^T dot): (1,256) . (tb,256)^T -> (1, tb).  The batch lands on the
    # lane axis, so the output row is lane-dense.
    q_row = jax.lax.dot_general(
        w3r, h2, (((1,), (1,)), ((), ())),
        preferred_element_type=jnp.float32)                     # (1, tb)
    out_ref[...] = q_row + b3


# ----------------------------------------------------------------------------
# Parameter folding (done once, outside the kernel)
# ----------------------------------------------------------------------------
def fold_params(params, compute_dtype=jnp.bfloat16):
    """Fold obs_FC / action_FC into the two halves of FC1 (valid because there
    is no nonlinearity between them), pack biases + the FC3 row, cast matmul
    weights to bf16.  Re-run whenever the underlying parameters change."""
    (w_obs, b_obs, w_act, b_act, w1, b1, w2, b2, w3, b3) = params
    d_emb = w_obs.shape[1]                          # 128
    w1_obs = w1[:d_emb, :]                          # rows acting on obs embed
    w1_act = w1[d_emb:, :]                          # rows acting on act embed

    w_of = (w_obs @ w1_obs).astype(compute_dtype)   # (d_obs, 256)
    w_af = (w_act @ w1_act).astype(compute_dtype)   # (d_act, 256)
    b_fold = b_obs @ w1_obs + b_act @ w1_act + b1   # (1, 256) f32

    vecs = jnp.concatenate([b_fold, b2, w3.reshape(1, -1)],
                           axis=0).astype(jnp.float32)           # (3, 256)
    return (w_of, w_af, w2.astype(compute_dtype), vecs,
            b3.reshape(-1).astype(jnp.float32))                  # b3: (1,)


# ----------------------------------------------------------------------------
# pallas_call builder (shared by the main gridded call and the tail call)
# ----------------------------------------------------------------------------
def _q_call(obs, acts, w_of, w_af, w2, vecs, b3, *, tb, n_tiles, parallel,
            vmem_limit):
    d_o = obs.shape[1]
    d_a = acts.shape[1]
    const2 = lambda i: (0, 0)                       # weights stay VMEM-resident
    return pl.pallas_call(
        q_kernel,
        out_shape=jax.ShapeDtypeStruct((1, n_tiles * tb), jnp.float32),
        grid=(n_tiles,),
        in_specs=[
            pl.BlockSpec((tb, d_o), lambda i: (i, 0)),      # obs tile
            pl.BlockSpec((tb, d_a), lambda i: (i, 0)),      # acts tile
            pl.BlockSpec((d_o, HIDDEN), const2),            # folded obs weights
            pl.BlockSpec((d_a, HIDDEN), const2),            # folded act weights
            pl.BlockSpec((HIDDEN, HIDDEN), const2),         # FC2 weights
            pl.BlockSpec((3, HIDDEN), const2),              # packed bias/w3 rows
            pl.BlockSpec(memory_space=pltpu.MemorySpace.SMEM),  # FC3 bias
        ],
        out_specs=pl.BlockSpec((1, tb), lambda i: (0, i)),  # lane-dense row
        compiler_params=pltpu.CompilerParams(
            dimension_semantics=(("parallel",) if parallel else ("arbitrary",)),
            vmem_limit_bytes=vmem_limit,
        ),
    )(obs, acts, w_of, w_af, w2, vecs, b3)


# ----------------------------------------------------------------------------
# Wrapper
# ----------------------------------------------------------------------------
def q_forward(obs, acts, folded, *, tile_b=4096):
    """Q(obs, acts) -> (B, 1) float32.  obs/acts may be float32 or bfloat16."""
    w_of, w_af, w2, vecs, b3 = folded
    B = obs.shape[0]

    # Lane-dense output rows => the main tile must be a multiple of 128 lanes.
    tile_b = max(128, min(8192, (int(tile_b) // 128) * 128))

    if B >= 256:
        # Guarantee >= 2 grid steps so v7x megacore gets both TensorCores.
        tb = min(tile_b, ((B // 2) // 128) * 128)
    elif B >= 128:
        tb = 128
    else:
        tb = 0
    n_full = (B // tb) if tb else 0
    tail = B - n_full * tb

    vmem_limit = 48 * 1024 * 1024
    parts = []
    if n_full:
        # Reads the original arrays directly; only rows [0, n_full*tb) are
        # touched by the grid -- no pad / copy of the bulk.
        main = _q_call(obs, acts, w_of, w_af, w2, vecs, b3,
                       tb=tb, n_tiles=n_full, parallel=True,
                       vmem_limit=vmem_limit)
        parts.append(main.reshape(-1))
    if tail:
        start = n_full * tb
        t_obs = obs[start:] if start else obs       # copies only the tail rows
        t_act = acts[start:] if start else acts
        t_out = _q_call(t_obs, t_act, w_of, w_af, w2, vecs, b3,
                        tb=tail, n_tiles=1, parallel=False,
                        vmem_limit=vmem_limit)
        parts.append(t_out.reshape(-1))
    q = parts[0] if len(parts) == 1 else jnp.concatenate(parts)
    return q.reshape(B, 1)


# ----------------------------------------------------------------------------
# Parameters + pure-JAX reference (original, un-folded semantics)
# ----------------------------------------------------------------------------
def init_params(key, dim_observation, dim_action):
    """Deterministic synthetic parameters (shapes match the PyTorch module)."""
    ks = jax.random.split(key, 10)

    def linear(kw, kb, d_in, d_out):
        bound = 1.0 / jnp.sqrt(float(d_in))
        w = jax.random.uniform(kw, (d_in, d_out), jnp.float32, -bound, bound)
        b = jax.random.uniform(kb, (1, d_out), jnp.float32, -bound, bound)
        return w, b

    w_obs, b_obs = linear(ks[0], ks[1], dim_observation, 128)   # obs_FC
    w_act, b_act = linear(ks[2], ks[3], dim_action, 128)        # action_FC
    w1, b1 = linear(ks[4], ks[5], 256, 256)                     # FC1
    w2, b2 = linear(ks[6], ks[7], 256, 256)                     # FC2
    w3, b3 = linear(ks[8], ks[9], 256, 1)                       # FC3
    return (w_obs, b_obs, w_act, b_act, w1, b1, w2, b2, w3, b3)


def q_forward_ref(obs, acts, params):
    """Pure-JAX f32 reference mirroring the PyTorch forward exactly."""
    (w_obs, b_obs, w_act, b_act, w1, b1, w2, b2, w3, b3) = params
    obs_emb = obs @ w_obs + b_obs
    act_emb = acts @ w_act + b_act
    emb = jnp.concatenate([obs_emb, act_emb], axis=-1)
    h1 = jnp.maximum(emb @ w1 + b1, 0.0)
    h2 = jnp.maximum(h1 @ w2 + b2, 0.0)
    return h2 @ w3 + b3


if __name__ == "__main__":
    dim_observation = 16
    dim_action = 8
    batch = 300       # -> 2 main grid steps of 128 rows + a 44-row tail call

    key = jax.random.PRNGKey(0)
    k_params, k_obs, k_act = jax.random.split(key, 3)

    params = init_params(k_params, dim_observation, dim_action)
    obs = jax.random.normal(k_obs, (batch, dim_observation), jnp.float32)
    acts = jax.random.normal(k_act, (batch, dim_action), jnp.float32)

    folded = fold_params(params)
    q = q_forward(obs, acts, folded)        # default tile_b=4096
    q = jax.block_until_ready(q)

    q_ref = q_forward_ref(obs, acts, params)
    assert q.shape == (batch, 1)
    # bf16 matmuls with f32 accumulation -> looser tolerance than pure f32.
    assert jnp.allclose(q, q_ref, atol=3e-2, rtol=3e-2), \
        float(jnp.max(jnp.abs(q - q_ref)))

    print("KERNEL_OK")
</pallas_src>

<mosaic_0001>
module attributes {stable_mosaic.version = 11 : i64} {
  func.func @q_kernel(%arg0: i32, %arg1: memref<128x16xf32, #tpu.memory_space<vmem>>, %arg2: memref<128x8xf32, #tpu.memory_space<vmem>>, %arg3: memref<16x256xbf16, #tpu.memory_space<vmem>>, %arg4: memref<8x256xbf16, #tpu.memory_space<vmem>>, %arg5: memref<256x256xbf16, #tpu.memory_space<vmem>>, %arg6: memref<3x256xf32, #tpu.memory_space<vmem>>, %arg7: memref<1xf32, #tpu.memory_space<smem>>, %arg8: memref<1x128xf32, #tpu.memory_space<vmem>>) attributes {dimension_semantics = [#tpu.dimension_semantics<parallel>], iteration_bounds = array<i64: 2>, scalar_prefetch = 0 : i64, scratch_operands = 0 : i64, tpu.core_type = #tpu.core_type<tc>, window_params = [{transform_indices = @transform_0, window_bounds = array<i64: 128, 16>}, {transform_indices = @transform_1, window_bounds = array<i64: 128, 8>}, {pipeline_mode = #tpu.pipeline_mode<synchronous>, transform_indices = @transform_2, window_bounds = array<i64: 16, 256>}, {pipeline_mode = #tpu.pipeline_mode<synchronous>, transform_indices = @transform_3, window_bounds = array<i64: 8, 256>}, {pipeline_mode = #tpu.pipeline_mode<synchronous>, transform_indices = @transform_4, window_bounds = array<i64: 256, 256>}, {pipeline_mode = #tpu.pipeline_mode<synchronous>, transform_indices = @transform_5, window_bounds = array<i64: 3, 256>}, {transform_indices = @transform_6, window_bounds = array<i64: 1>}, {transform_indices = @transform_7, window_bounds = array<i64: 1, 128>}]} {
    %c0 = arith.constant 0 : index
    %c0_0 = arith.constant 0 : index
    %0 = vector.load %arg6[%c0, %c0_0] : memref<3x256xf32, #tpu.memory_space<vmem>>, vector<3x256xf32>
    %1 = vector.extract_strided_slice %0 {offsets = [0, 0], sizes = [1, 256], strides = [1, 1]} : vector<3x256xf32> to vector<1x256xf32>
    %2 = vector.extract_strided_slice %0 {offsets = [1, 0], sizes = [1, 256], strides = [1, 1]} : vector<3x256xf32> to vector<1x256xf32>
    %3 = vector.extract_strided_slice %0 {offsets = [2, 0], sizes = [1, 256], strides = [1, 1]} : vector<3x256xf32> to vector<1x256xf32>
    %c0_1 = arith.constant 0 : index
    %4 = memref.load %arg7[%c0_1] : memref<1xf32, #tpu.memory_space<smem>>
    %c0_2 = arith.constant 0 : index
    %c0_3 = arith.constant 0 : index
    %5 = vector.load %arg1[%c0_2, %c0_3] : memref<128x16xf32, #tpu.memory_space<vmem>>, vector<128x16xf32>
    %6 = arith.truncf %5 : vector<128x16xf32> to vector<128x16xbf16>
    %c0_4 = arith.constant 0 : index
    %c0_5 = arith.constant 0 : index
    %7 = vector.load %arg2[%c0_4, %c0_5] : memref<128x8xf32, #tpu.memory_space<vmem>>, vector<128x8xf32>
    %8 = arith.truncf %7 : vector<128x8xf32> to vector<128x8xbf16>
    %c0_6 = arith.constant 0 : index
    %c0_7 = arith.constant 0 : index
    %9 = vector.load %arg3[%c0_6, %c0_7] : memref<16x256xbf16, #tpu.memory_space<vmem>>, vector<16x256xbf16>
    %cst = arith.constant dense<0.000000e+00> : vector<128x256xf32>
    %10 = tpu.matmul %6, %9, %cst {dimension_numbers = #tpu.dot_dimension_numbers<[1], [0], [0], [1], [0, 0, 1, 1], [], []>} : vector<128x16xbf16>, vector<16x256xbf16>, vector<128x256xf32> -> vector<128x256xf32>
    %c0_8 = arith.constant 0 : index
    %c0_9 = arith.constant 0 : index
    %11 = vector.load %arg4[%c0_8, %c0_9] : memref<8x256xbf16, #tpu.memory_space<vmem>>, vector<8x256xbf16>
    %cst_10 = arith.constant dense<0.000000e+00> : vector<128x256xf32>
    %12 = tpu.matmul %8, %11, %cst_10 {dimension_numbers = #tpu.dot_dimension_numbers<[1], [0], [0], [1], [0, 0, 1, 1], [], []>} : vector<128x8xbf16>, vector<8x256xbf16>, vector<128x256xf32> -> vector<128x256xf32>
    %13 = arith.addf %10, %12 : vector<128x256xf32>
    %14 = vector.broadcast %1 : vector<1x256xf32> to vector<128x256xf32>
    %15 = arith.addf %13, %14 : vector<128x256xf32>
    %cst_11 = arith.constant 0.000000e+00 : f32
    %16 = vector.broadcast %cst_11 : f32 to vector<128x256xf32>
    %17 = arith.maximumf %15, %16 : vector<128x256xf32>
    %18 = arith.truncf %17 : vector<128x256xf32> to vector<128x256xbf16>
    %c0_12 = arith.constant 0 : index
    %c0_13 = arith.constant 0 : index
    %19 = vector.load %arg5[%c0_12, %c0_13] : memref<256x256xbf16, #tpu.memory_space<vmem>>, vector<256x256xbf16>
    %cst_14 = arith.constant dense<0.000000e+00> : vector<128x256xf32>
    %20 = tpu.matmul %18, %19, %cst_14 {dimension_numbers = #tpu.dot_dimension_numbers<[1], [0], [0], [1], [0, 0, 1, 1], [], []>} : vector<128x256xbf16>, vector<256x256xbf16>, vector<128x256xf32> -> vector<128x256xf32>
    %21 = vector.broadcast %2 : vector<1x256xf32> to vector<128x256xf32>
    %22 = arith.addf %20, %21 : vector<128x256xf32>
    %cst_15 = arith.constant 0.000000e+00 : f32
    %23 = vector.broadcast %cst_15 : f32 to vector<128x256xf32>
    %24 = arith.maximumf %22, %23 : vector<128x256xf32>
    %cst_16 = arith.constant dense<0.000000e+00> : vector<1x128xf32>
    %25 = tpu.matmul %3, %24, %cst_16 {dimension_numbers = #tpu.dot_dimension_numbers<[1], [1], [0], [0], [0, 0, 1, 0], [], []>} : vector<1x256xf32>, vector<128x256xf32>, vector<1x128xf32> -> vector<1x128xf32>
    %26 = vector.broadcast %4 : f32 to vector<1x128xf32>
    %27 = arith.addf %25, %26 : vector<1x128xf32>
    %c0_17 = arith.constant 0 : index
    %c0_18 = arith.constant 0 : index
    %28 = vector.load %arg8[%c0_17, %c0_18] : memref<1x128xf32, #tpu.memory_space<vmem>>, vector<1x128xf32>
    tpu.vector_store %arg8[%c0_17, %c0_18], %27 {strides = array<i32>} : memref<1x128xf32, #tpu.memory_space<vmem>>, vector<1x128xf32>,
    return
  }
  func.func @transform_0(%arg0: i32) -> (i32, i32) {
    %c0_i32 = arith.constant 0 : i32
    %c0_i32_0 = arith.constant 0 : i32
    return %arg0, %c0_i32 : i32, i32
  }
  func.func @transform_1(%arg0: i32) -> (i32, i32) {
    %c0_i32 = arith.constant 0 : i32
    %c0_i32_0 = arith.constant 0 : i32
    return %arg0, %c0_i32 : i32, i32
  }
  func.func @transform_2(%arg0: i32) -> (i32, i32) {
    %c0_i32 = arith.constant 0 : i32
    %c0_i32_0 = arith.constant 0 : i32
    %c0_i32_1 = arith.constant 0 : i32
    return %c0_i32, %c0_i32_0 : i32, i32
  }
  func.func @transform_3(%arg0: i32) -> (i32, i32) {
    %c0_i32 = arith.constant 0 : i32
    %c0_i32_0 = arith.constant 0 : i32
    %c0_i32_1 = arith.constant 0 : i32
    return %c0_i32, %c0_i32_0 : i32, i32
  }
  func.func @transform_4(%arg0: i32) -> (i32, i32) {
    %c0_i32 = arith.constant 0 : i32
    %c0_i32_0 = arith.constant 0 : i32
    %c0_i32_1 = arith.constant 0 : i32
    return %c0_i32, %c0_i32_0 : i32, i32
  }
  func.func @transform_5(%arg0: i32) -> (i32, i32) {
    %c0_i32 = arith.constant 0 : i32
    %c0_i32_0 = arith.constant 0 : i32
    %c0_i32_1 = arith.constant 0 : i32
    return %c0_i32, %c0_i32_0 : i32, i32
  }
  func.func @transform_6(%arg0: i32) -> i32 {
    %c0_i32 = arith.constant 0 : i32
    %c0_i32_0 = arith.constant 0 : i32
    return %c0_i32 : i32
  }
  func.func @transform_7(%arg0: i32) -> (i32, i32) {
    %c0_i32 = arith.constant 0 : i32
    %c0_i32_0 = arith.constant 0 : i32
    return %c0_i32, %arg0 : i32, i32
  }
}

</mosaic_0001>

<llo_original>
// kernel: tpu_custom_call.1
$region0: #{tpu_custom_call.1}
  #allocation0 [shape = 'u32[]', space=smem, size = 0x4, offset = 0x4, fixed_abs, tag = 'smem constant byte address 0x4 - core index']
  #allocation1 [shape = 'u32[144,128]{1,0:T(1,128)}', space=vmem, size = 0x12000, scoped, tag = 'internal scratch']
  #allocation2 [shape = 'f32[1]{0:T(128)S(6)}', space=smem, size = 0x200, scoped, tag = 'scoped memory for tpu_custom_call.1']
  %s0 = inlined_call_operand.vmem [shape: f32[300,16], index: 0, kind: input, shape index: {}]
  %s1 = inlined_call_operand.vmem [shape: f32[300,8], index: 1, kind: input, shape index: {}]
  %s2 = inlined_call_operand.vmem [shape: bf16[16,256], index: 2, kind: input, shape index: {}]
  %s3 = inlined_call_operand.vmem [shape: bf16[8,256], index: 3, kind: input, shape index: {}]
  %s4 = inlined_call_operand.vmem [shape: bf16[256,256], index: 4, kind: input, shape index: {}]
  %s5 = inlined_call_operand.vmem [shape: f32[3,256], index: 5, kind: input, shape index: {}]
  %s6 = inlined_call_operand.<no memory space> [shape: f32[1], index: 6, kind: input, shape index: {}]
  %s7 = inlined_call_operand.hbm [shape: f32[1,256], index: 7, kind: output, shape index: {}]
  %s8 = sld [smem:[#allocation0]]
  $region61: #{tpu_custom_call.1} parent=0
    _
  %s10 = ssub.s32 1, %s8
  %s11 = scalar_select 0, %s10, %s8
  %12 = sst [smem:[#allocation2]] %s6
  $region1: #{tpu_custom_call.1} parent=0
    #allocation3 [shape = 'u8[1024]{0}', space=vmem, size = 0x400, scoped, tag = 'output window, operand 0']
    #allocation4 [shape = 's32[2]{0}', space=sflag, size = 0x8, scoped, tag = 'scoped memory for tpu_custom_call.1']
    %13 = vsyncpa [#allocation4], 0
    %s14 = scalar_lea.sflag [#allocation4], 1
    %15 = vsyncpa %s14, 0
    loop: start=0, step=1, limit=4
    $region2: #{tpu_custom_call.1} parent=1 // loop_pre_header
      _
    $region3: #{tpu_custom_call.1} parent=1 // loop_header
      %s17 = sphi 0, %s21
      %p18 = scmp.ge.s32.totalorder %s17, 4
      %s27 = sphi 0, %s29
      %s30 = sphi 0, %s27
      %s31 = sphi 0, %s30
      %s47 = sphi 0, %s31
      %s53 = sphi 0, %s55
      %s56 = sphi 0, %s53
      %s57 = sphi 0, %s56
      %s73 = sphi 0, %s57
      %s77 = sphi 0, %s77
      %s79 = sphi 0, %s77
      %s80 = sphi 0, %s79
      %s94 = sphi 0, %s80
      %s98 = sphi 0, %s98
      %s100 = sphi 0, %s98
      %s101 = sphi 0, %s100
      %s115 = sphi 0, %s101
      %s119 = sphi 0, %s119
      %s121 = sphi 0, %s119
      %s122 = sphi 0, %s121
      %s136 = sphi 0, %s122
      %s140 = sphi 0, %s140
      %s142 = sphi 0, %s140
      %s143 = sphi 0, %s142
      %s157 = sphi 0, %s143
      %s161 = sphi 0, %s161
      %s163 = sphi 0, %s161
      %s164 = sphi 0, %s163
      %s178 = sphi 0, %s164
      %s184 = sphi 0, %s186
      %s187 = sphi 0, %s184
      %s188 = sphi 0, %s187
      %s204 = sphi 0, %s188
    $region4: #{tpu_custom_call.1} parent=1 // loop_header_branch
      %20 = sbr.rel (%p18) target = $region8
    $region5: #{tpu_custom_call.1} parent=1 // loop_body
      %s22 = ssub.s32 %s17, 1
      %s23 = ssub.s32 %s17, 2
      %s24 = sadd.s32 %s17, 1
      %s25 = ssub.s32 %s17, %s24
      %p26 = scmp.eq.s32.totalorder %s25, 0
      %s28 = sadd.s32 %s27, 1
      %s29 = scalar_select %p26, %s27, %s28
      %p32 = pneg %p26
      %p33 = scmp.eq.s32.totalorder %s17, 1
      %p34 = por %p32, %p33
      %p35 = scmp.ne.s32.totalorder %s27, %s30
      %p36 = scmp.eq.s32.totalorder %s17, 0
      %p37 = por %p35, %p36
      %p38 = scmp.ne.s32.totalorder %s27, %s30
      %p39 = scmp.eq.s32.totalorder %s22, 1
      %p40 = por %p38, %p39
      %p41 = scmp.ne.s32.totalorder %s30, %s31
      %p42 = scmp.eq.s32.totalorder %s22, 0
      %p43 = por %p41, %p42
      %p44 = scmp.ne.s32.totalorder %s30, %s31
      %p45 = scmp.eq.s32.totalorder %s23, 1
      %p46 = por %p44, %p45
      %p48 = scmp.ne.s32.totalorder %s31, %s47
      %p49 = scmp.eq.s32.totalorder %s23, 0
      %p50 = por %p48, %p49
      %s51 = ssub.s32 %s17, %s24
      %p52 = scmp.eq.s32.totalorder %s51, 0
      %s54 = sadd.s32 %s53, 1
      %s55 = scalar_select %p52, %s53, %s54
      %p58 = pneg %p52
      %p59 = scmp.eq.s32.totalorder %s17, 1
      %p60 = por %p58, %p59
      %p61 = scmp.ne.s32.totalorder %s53, %s56
      %p62 = scmp.eq.s32.totalorder %s17, 0
      %p63 = por %p61, %p62
      %p64 = scmp.ne.s32.totalorder %s53, %s56
      %p65 = scmp.eq.s32.totalorder %s22, 1
      %p66 = por %p64, %p65
      %p67 = scmp.ne.s32.totalorder %s56, %s57
      %p68 = scmp.eq.s32.totalorder %s22, 0
      %p69 = por %p67, %p68
      %p70 = scmp.ne.s32.totalorder %s56, %s57
      %p71 = scmp.eq.s32.totalorder %s23, 1
      %p72 = por %p70, %p71
      %p74 = scmp.ne.s32.totalorder %s57, %s73
      %p75 = scmp.eq.s32.totalorder %s23, 0
      %p76 = por %p74, %p75
      %s78 = sadd.s32 %s77, 1
      %p81 = scmp.eq.s32.totalorder %s17, 1
      %p82 = scmp.ne.s32.totalorder %s77, %s79
      %p83 = scmp.eq.s32.totalorder %s17, 0
      %p84 = por %p82, %p83
      %p85 = scmp.ne.s32.totalorder %s77, %s79
      %p86 = scmp.eq.s32.totalorder %s22, 1
      %p87 = por %p85, %p86
      %p88 = scmp.ne.s32.totalorder %s79, %s80
      %p89 = scmp.eq.s32.totalorder %s22, 0
      %p90 = por %p88, %p89
      %p91 = scmp.ne.s32.totalorder %s79, %s80
      %p92 = scmp.eq.s32.totalorder %s23, 1
      %p93 = por %p91, %p92
      %p95 = scmp.ne.s32.totalorder %s80, %s94
      %p96 = scmp.eq.s32.totalorder %s23, 0
      %p97 = por %p95, %p96
      %s99 = sadd.s32 %s98, 1
      %p102 = scmp.eq.s32.totalorder %s17, 1
      %p103 = scmp.ne.s32.totalorder %s98, %s100
      %p104 = scmp.eq.s32.totalorder %s17, 0
      %p105 = por %p103, %p104
      %p106 = scmp.ne.s32.totalorder %s98, %s100
      %p107 = scmp.eq.s32.totalorder %s22, 1
      %p108 = por %p106, %p107
      %p109 = scmp.ne.s32.totalorder %s100, %s101
      %p110 = scmp.eq.s32.totalorder %s22, 0
      %p111 = por %p109, %p110
      %p112 = scmp.ne.s32.totalorder %s100, %s101
      %p113 = scmp.eq.s32.totalorder %s23, 1
      %p114 = por %p112, %p113
      %p116 = scmp.ne.s32.totalorder %s101, %s115
      %p117 = scmp.eq.s32.totalorder %s23, 0
      %p118 = por %p116, %p117
      %s120 = sadd.s32 %s119, 1
      %p123 = scmp.eq.s32.totalorder %s17, 1
      %p124 = scmp.ne.s32.totalorder %s119, %s121
      %p125 = scmp.eq.s32.totalorder %s17, 0
      %p126 = por %p124, %p125
      %p127 = scmp.ne.s32.totalorder %s119, %s121
      %p128 = scmp.eq.s32.totalorder %s22, 1
      %p129 = por %p127, %p128
      %p130 = scmp.ne.s32.totalorder %s121, %s122
      %p131 = scmp.eq.s32.totalorder %s22, 0
      %p132 = por %p130, %p131
      %p133 = scmp.ne.s32.totalorder %s121, %s122
      %p134 = scmp.eq.s32.totalorder %s23, 1
      %p135 = por %p133, %p134
      %p137 = scmp.ne.s32.totalorder %s122, %s136
      %p138 = scmp.eq.s32.totalorder %s23, 0
      %p139 = por %p137, %p138
      %s141 = sadd.s32 %s140, 1
      %p144 = scmp.eq.s32.totalorder %s17, 1
      %p145 = scmp.ne.s32.totalorder %s140, %s142
      %p146 = scmp.eq.s32.totalorder %s17, 0
      %p147 = por %p145, %p146
      %p148 = scmp.ne.s32.totalorder %s140, %s142
      %p149 = scmp.eq.s32.totalorder %s22, 1
      %p150 = por %p148, %p149
      %p151 = scmp.ne.s32.totalorder %s142, %s143
      %p152 = scmp.eq.s32.totalorder %s22, 0
      %p153 = por %p151, %p152
      %p154 = scmp.ne.s32.totalorder %s142, %s143
      %p155 = scmp.eq.s32.totalorder %s23, 1
      %p156 = por %p154, %p155
      %p158 = scmp.ne.s32.totalorder %s143, %s157
      %p159 = scmp.eq.s32.totalorder %s23, 0
      %p160 = por %p158, %p159
      %s162 = sadd.s32 %s161, 1
      %p165 = scmp.eq.s32.totalorder %s17, 1
      %p166 = scmp.ne.s32.totalorder %s161, %s163
      %p167 = scmp.eq.s32.totalorder %s17, 0
      %p168 = por %p166, %p167
      %p169 = scmp.ne.s32.totalorder %s161, %s163
      %p170 = scmp.eq.s32.totalorder %s22, 1
      %p171 = por %p169, %p170
      %p172 = scmp.ne.s32.totalorder %s163, %s164
      %p173 = scmp.eq.s32.totalorder %s22, 0
      %p174 = por %p172, %p173
      %p175 = scmp.ne.s32.totalorder %s163, %s164
      %p176 = scmp.eq.s32.totalorder %s23, 1
      %p177 = por %p175, %p176
      %p179 = scmp.ne.s32.totalorder %s164, %s178
      %p180 = scmp.eq.s32.totalorder %s23, 0
      %p181 = por %p179, %p180
      %s182 = ssub.s32 %s17, %s24
      %p183 = scmp.eq.s32.totalorder %s182, 0
      %s185 = sadd.s32 %s184, 1
      %s186 = scalar_select %p183, %s184, %s185
      %p189 = pneg %p183
      %p190 = scmp.eq.s32.totalorder %s17, 1
      %p191 = por %p189, %p190
      %p192 = scmp.ne.s32.totalorder %s184, %s187
      %p193 = scmp.eq.s32.totalorder %s17, 0
      %p194 = por %p192, %p193
      %p195 = scmp.ne.s32.totalorder %s184, %s187
      %p196 = scmp.eq.s32.totalorder %s22, 1
      %p197 = por %p195, %p196
      %p198 = scmp.ne.s32.totalorder %s187, %s188
      %p199 = scmp.eq.s32.totalorder %s22, 0
      %p200 = por %p198, %p199
      %p201 = scmp.ne.s32.totalorder %s187, %s188
      %p202 = scmp.eq.s32.totalorder %s23, 1
      %p203 = por %p201, %p202
      %p205 = scmp.ne.s32.totalorder %s188, %s204
      %p206 = scmp.eq.s32.totalorder %s23, 0
      %p207 = por %p205, %p206
      %p208 = scmp.le.s32.totalorder 1, %s17
      %p209 = scmp.lt.s32.totalorder %s17, 3
      %p210 = pnand %p208, %p209
      %p211 = pneg %p210
      // Predicated region
      $region9: #{tpu_custom_call.1} parent=5 // pred_check
        _
      $region10: #{tpu_custom_call.1} parent=5 // pred_check_branch
        %213 = sbr.rel (%p210) target = $region12
      $region11: #{tpu_custom_call.1} parent=5 // pred_region
        %s214 = ssub.s32 %s17, 1
        // Predicated region
        $region13: #{tpu_custom_call.1} parent=11 // pred_check
          %p215 = pneg %p90
        $region14: #{tpu_custom_call.1} parent=11 // pred_check_branch
          %217 = sbr.rel (%p215) target = $region16
        $region15: #{tpu_custom_call.1} parent=11 // pred_region
          _
        $region16: #{tpu_custom_call.1} parent=11 // pred_fallthru
          _
        // Predicated region
        $region17: #{tpu_custom_call.1} parent=11 // pred_check
          %p218 = pneg %p111
        $region18: #{tpu_custom_call.1} parent=11 // pred_check_branch
          %220 = sbr.rel (%p218) target = $region20
        $region19: #{tpu_custom_call.1} parent=11 // pred_region
          _
        $region20: #{tpu_custom_call.1} parent=11 // pred_fallthru
          _
        // Predicated region
        $region21: #{tpu_custom_call.1} parent=11 // pred_check
          %p221 = pneg %p132
        $region22: #{tpu_custom_call.1} parent=11 // pred_check_branch
          %223 = sbr.rel (%p221) target = $region24
        $region23: #{tpu_custom_call.1} parent=11 // pred_region
          _
        $region24: #{tpu_custom_call.1} parent=11 // pred_fallthru
          _
        // Predicated region
        $region25: #{tpu_custom_call.1} parent=11 // pred_check
          %p224 = pneg %p153
        $region26: #{tpu_custom_call.1} parent=11 // pred_check_branch
          %226 = sbr.rel (%p224) target = $region28
        $region27: #{tpu_custom_call.1} parent=11 // pred_region
          _
        $region28: #{tpu_custom_call.1} parent=11 // pred_fallthru
          _
        // Predicated region
        $region29: #{tpu_custom_call.1} parent=11 // pred_check
          %p227 = pneg %p174
        $region30: #{tpu_custom_call.1} parent=11 // pred_check_branch
          %229 = sbr.rel (%p227) target = $region32
        $region31: #{tpu_custom_call.1} parent=11 // pred_region
          _
        $region32: #{tpu_custom_call.1} parent=11 // pred_fallthru
          _
      $region12: #{tpu_custom_call.1} parent=5 // pred_fallthru
        _
      %p230 = scmp.lt.s32.totalorder %s17, 2
      // Predicated region
      $region33: #{tpu_custom_call.1} parent=5 // pred_check
        %p231 = pneg %p230
      $region34: #{tpu_custom_call.1} parent=5 // pred_check_branch
        %233 = sbr.rel (%p231) target = $region36
      $region35: #{tpu_custom_call.1} parent=5 // pred_region
        // Predicated region
        $region37: #{tpu_custom_call.1} parent=35 // pred_check
          %p234 = pneg %p37
        $region38: #{tpu_custom_call.1} parent=35 // pred_check_branch
          %236 = sbr.rel (%p234) target = $region40
        $region39: #{tpu_custom_call.1} parent=35 // pred_region
          %s237 = smul.u32 16, %s17
          %s238 = ssub.s32 38, %s237
          %p239 = scmp.lt.s32.totalorder %s238, 16
          %s240 = scalar_select %p239, %s238, 16
          %s241 = smul.u32 128, %s240
          %p242 = scmp.lt.s32.totalorder %s237, 37
          %s243 = scalar_select %p242, %s237, 37
          %s244 = smul.addr %s243, 8
          %s245 = scalar_lea.vmem %s0, %s244
          %s246 = smul.u32 16, %s17
          %s247 = ssub.s32 38, %s246
          %p248 = scmp.lt.s32.totalorder %s247, 16
          %s249 = scalar_select %p248, %s247, 16
          %s250 = smul.u32 128, %s249
        $region40: #{tpu_custom_call.1} parent=35 // pred_fallthru
          _
        // Predicated region
        $region41: #{tpu_custom_call.1} parent=35 // pred_check
          %p251 = pneg %p63
        $region42: #{tpu_custom_call.1} parent=35 // pred_check_branch
          %253 = sbr.rel (%p251) target = $region44
        $region43: #{tpu_custom_call.1} parent=35 // pred_region
          %s254 = smul.u32 16, %s17
          %s255 = ssub.s32 38, %s254
          %p256 = scmp.lt.s32.totalorder %s255, 16
          %s257 = scalar_select %p256, %s255, 16
          %s258 = smul.u32 128, %s257
          %p259 = scmp.lt.s32.totalorder %s254, 37
          %s260 = scalar_select %p259, %s254, 37
          %s261 = smul.addr %s260, 8
          %s262 = scalar_lea.vmem %s1, %s261
          %s263 = smul.u32 16, %s17
          %s264 = ssub.s32 38, %s263
          %p265 = scmp.lt.s32.totalorder %s264, 16
          %s266 = scalar_select %p265, %s264, 16
          %s267 = smul.u32 128, %s266
        $region44: #{tpu_custom_call.1} parent=35 // pred_fallthru
          _
      $region36: #{tpu_custom_call.1} parent=5 // pred_fallthru
        _
      %p268 = scmp.le.s32.totalorder 1, %s17
      %p269 = scmp.lt.s32.totalorder %s17, 3
      %p270 = pnand %p268, %p269
      %p271 = pneg %p270
      // Predicated region
      $region45: #{tpu_custom_call.1} parent=5 // pred_check
        _
      $region46: #{tpu_custom_call.1} parent=5 // pred_check_branch
        %273 = sbr.rel (%p270) target = $region48
      $region47: #{tpu_custom_call.1} parent=5 // pred_region
        %s274 = ssub.s32 %s17, 1
        %s275 = smul.u32 16, %s22
        %s276 = ssub.s32 38, %s275
        %p277 = scmp.lt.s32.totalorder %s276, 16
        %s278 = scalar_select %p277, %s276, 16
        %s279 = smul.u32 128, %s278
        %p280 = scmp.lt.s32.totalorder %s275, 37
        %s281 = scalar_select %p280, %s275, 37
        %s282 = smul.addr %s281, 8
        %s283 = scalar_lea.vmem %s0, %s282
        %p284 = pneg %p43
        %p285 = pneg %p40
        %s286 = smul.u32 16, %s22
        %s287 = ssub.s32 38, %s286
        %p288 = scmp.lt.s32.totalorder %s287, 16
        %s289 = scalar_select %p288, %s287, 16
        %s290 = smul.u32 128, %s289
        %p291 = scmp.lt.s32.totalorder %s286, 37
        %s292 = scalar_select %p291, %s286, 37
        %s293 = smul.addr %s292, 8
        %s294 = scalar_lea.vmem %s1, %s293
        %p295 = pneg %p69
        %p296 = pneg %p66
        %p297 = pneg %p90
        %p298 = pneg %p87
        %p299 = pneg %p111
        %p300 = pneg %p108
        %p301 = pneg %p132
        %p302 = pneg %p129
        %p303 = pneg %p153
        %p304 = pneg %p150
        %p305 = pneg %p174
        %p306 = pneg %p171
        %p307 = pneg %p200
        %p308 = pneg %p197
        %s309 = sand.u32 %s187, 1
        %s310 = scalar_lea.sflag [#allocation4], %s309
        %s311 = sand.u32 %s187, 1
        %s312 = scalar_lea.vmem [#allocation3], %s311
        %s313 = smul.u32 16, %s22
        %s314 = ssub.s32 38, %s313
        %p315 = scmp.lt.s32.totalorder %s314, 16
        %s316 = scalar_select %p315, %s314, 16
        %s317 = smul.u32 128, %s316
        %p318 = scmp.lt.s32.totalorder %s313, 37
        %s319 = scalar_select %p318, %s313, 37
        %s320 = smul.addr %s319, 8
        %s321 = scalar_lea.vmem %s0, %s320
        %s322 = smul.u32 16, %s22
        %s323 = ssub.s32 38, %s322
        %p324 = scmp.lt.s32.totalorder %s323, 16
        %s325 = scalar_select %p324, %s323, 16
        %s326 = smul.u32 128, %s325
        %s327 = smul.u32 16, %s22
        %s328 = ssub.s32 38, %s327
        %p329 = scmp.lt.s32.totalorder %s328, 16
        %s330 = scalar_select %p329, %s328, 16
        %s331 = smul.u32 128, %s330
        %p332 = scmp.lt.s32.totalorder %s327, 37
        %s333 = scalar_select %p332, %s327, 37
        %s334 = smul.addr %s333, 8
        %s335 = scalar_lea.vmem %s1, %s334
        %s336 = smul.u32 16, %s22
        %s337 = ssub.s32 38, %s336
        %p338 = scmp.lt.s32.totalorder %s337, 16
        %s339 = scalar_select %p338, %s337, 16
        %s340 = smul.u32 128, %s339
        %v342 = vld [vmem:[%s5] sm:$0x77]
        %s343 = sld [smem:[#allocation2]]
        %v344 = vld [vmem:[%s321] sm:$0xff]
        %v345 = vld [vmem:[%s321 + $0x8] sm:$0xff]
        %v346 = vld [vmem:[%s321 + $0x10] sm:$0xff]
        %v347 = vld [vmem:[%s321 + $0x18] sm:$0xff]
        %v348 = vld [vmem:[%s321 + $0x20] sm:$0xff]
        %v349 = vld [vmem:[%s321 + $0x28] sm:$0xff]
        %v350 = vld [vmem:[%s321 + $0x30] sm:$0xff]
        %v351 = vld [vmem:[%s321 + $0x38] sm:$0xff]
        %v352 = vld [vmem:[%s321 + $0x40] sm:$0xff]
        %v353 = vld [vmem:[%s321 + $0x48] sm:$0xff]
        %v354 = vld [vmem:[%s321 + $0x50] sm:$0xff]
        %v355 = vld [vmem:[%s321 + $0x58] sm:$0xff]
        %v356 = vld [vmem:[%s321 + $0x60] sm:$0xff]
        %v357 = vld [vmem:[%s321 + $0x68] sm:$0xff]
        %v358 = vld [vmem:[%s321 + $0x70] sm:$0xff]
        %v359 = vld [vmem:[%s321 + $0x78] sm:$0xff]
        %v360 = vpack.c.bf16 %v345, %v344
        %v361 = vpack.c.bf16 %v347, %v346
        %v362 = vpack.c.bf16 %v349, %v348
        %v363 = vpack.c.bf16 %v351, %v350
        %v364 = vpack.c.bf16 %v353, %v352
        %v365 = vpack.c.bf16 %v355, %v354
        %v366 = vpack.c.bf16 %v357, %v356
        %v367 = vpack.c.bf16 %v359, %v358
        %v368 = vld [vmem:[%s335] sm:$0xff]
        %v369 = vld [vmem:[%s335 + $0x8] sm:$0xff]
        %v370 = vld [vmem:[%s335 + $0x10] sm:$0xff]
        %v371 = vld [vmem:[%s335 + $0x18] sm:$0xff]
        %v372 = vld [vmem:[%s335 + $0x20] sm:$0xff]
        %v373 = vld [vmem:[%s335 + $0x28] sm:$0xff]
        %v374 = vld [vmem:[%s335 + $0x30] sm:$0xff]
        %v375 = vld [vmem:[%s335 + $0x38] sm:$0xff]
        %v376 = vld [vmem:[%s335 + $0x40] sm:$0xff]
        %v377 = vld [vmem:[%s335 + $0x48] sm:$0xff]
        %v378 = vld [vmem:[%s335 + $0x50] sm:$0xff]
        %v379 = vld [vmem:[%s335 + $0x58] sm:$0xff]
        %v380 = vld [vmem:[%s335 + $0x60] sm:$0xff]
        %v381 = vld [vmem:[%s335 + $0x68] sm:$0xff]
        %v382 = vld [vmem:[%s335 + $0x70] sm:$0xff]
        %v383 = vld [vmem:[%s335 + $0x78] sm:$0xff]
        %v384 = vpack.c.bf16 %v369, %v368
        %v385 = vpack.c.bf16 %v371, %v370
        %v386 = vpack.c.bf16 %v373, %v372
        %v387 = vpack.c.bf16 %v375, %v374
        %v388 = vpack.c.bf16 %v377, %v376
        %v389 = vpack.c.bf16 %v379, %v378
        %v390 = vpack.c.bf16 %v381, %v380
        %v391 = vpack.c.bf16 %v383, %v382
        %v392 = vld [vmem:[%s2] sm:$0xff]
        %v393 = vld [vmem:[%s2 + $0x8] sm:$0xff]
        %v394 = vld [vmem:[%s3] sm:$0xff]
        %v396 = vunpack.c.l.b16 %v394
        %v397 = vunpack.c.h.b16 %v394
        %v398 = vpack.c.b16 %v396, %v396
        %v399 = vpack.c.b16 %v397, %v397
        %vm400 = vcmask 64512
        %v402 = vsel %vm400, %v384, 0
        %v405 = vsel %vm400, %v385, 0
        %v408 = vsel %vm400, %v386, 0
        %v411 = vsel %vm400, %v387, 0
        %v414 = vsel %vm400, %v388, 0
        %v417 = vsel %vm400, %v389, 0
        %v420 = vsel %vm400, %v390, 0
        %v423 = vsel %vm400, %v391, 0
        %vm425 = vcmask 1043456
        %v427 = vsel %vm425, %v398, 0
        %v430 = vsel %vm425, %v399, 0
        %432 = vmatprep.subr.bf16.mxu0 %v430
        %433 = vmatpush1.bf16.msra.mxu0 %v427
        %434 = vmatprep.subr.bf16.mxu0 0
        %435 = vmatpush1.bf16.msra.mxu0 0
        %436 = vmatprep.subr.bf16.mxu0 0
        %437 = vmatpush1.bf16.msra.mxu0 0
        %438 = vmatprep.subr.bf16.mxu0 0
        %439 = vmatpush1.bf16.msra.mxu0 0
        %440 = vmatprep.subr.bf16.mxu0 0
        %441 = vmatpush1.bf16.msra.mxu0 0
        %442 = vmatprep.subr.bf16.mxu0 0
        %443 = vmatpush1.bf16.msra.mxu0 0
        %444 = vmatprep.subr.bf16.mxu0 0
        %445 = vmatpush1.bf16.msra.mxu0 0
        %446 = vmatprep.subr.bf16.mxu0 0
        %447 = vmatpush1.bf16.msra.mxu0 0
        %448 = vmatprep.subr.bf16.mxu0 0
        %449 = vmatpush1.bf16.msra.mxu0 0
        %450 = vmatprep.subr.bf16.mxu0 0
        %451 = vmatpush1.bf16.msra.mxu0 0
        %452 = vmatprep.subr.bf16.mxu0 0
        %453 = vmatpush1.bf16.msra.mxu0 0
        %454 = vmatprep.subr.bf16.mxu0 0
        %455 = vmatpush1.bf16.msra.mxu0 0
        %456 = vmatprep.subr.bf16.mxu0 0
        %457 = vmatpush1.bf16.msra.mxu0 0
        %458 = vmatprep.subr.bf16.mxu0 0
        %459 = vmatpush1.bf16.msra.mxu0 0
        %460 = vmatprep.subr.bf16.mxu0 0
        %461 = vmatpush1.bf16.msra.mxu0 0
        %462 = vmatprep.subr.bf16.mxu0 0
        %463 = vmatpush1.bf16.msra.mxu0 0
        %464 = vmatprep.mubr.bf16.mxu0 0
        %465 = vmatmul.mubr.bf16.gmra.mrb[0].mxu0 %v402
        %v466 = vpop.f32.mrb[0].mxu0
        %v467 = vadd.f32 0.0, %v466
        %v468 = vpop.f32.mrb[0].mxu0
        %v469 = vadd.f32 0.0, %v468
        %v470 = vpop.f32.mrb[0].mxu0
        %v471 = vadd.f32 0.0, %v470
        %v472 = vpop.f32.mrb[0].mxu0
        %v473 = vadd.f32 0.0, %v472
        %474 = vmatprep.mubr.bf16.mxu0 0
        %475 = vmatmul.mubr.bf16.gmra.mrb[0].mxu0 %v405
        %v476 = vpop.f32.mrb[0].mxu0
        %v477 = vadd.f32 0.0, %v476
        %v478 = vpop.f32.mrb[0].mxu0
        %v479 = vadd.f32 0.0, %v478
        %v480 = vpop.f32.mrb[0].mxu0
        %v481 = vadd.f32 0.0, %v480
        %v482 = vpop.f32.mrb[0].mxu0
        %v483 = vadd.f32 0.0, %v482
        %484 = vmatprep.mubr.bf16.mxu0 0
        %485 = vmatmul.mubr.bf16.gmra.mrb[0].mxu0 %v408
        %v486 = vpop.f32.mrb[0].mxu0
        %v487 = vadd.f32 0.0, %v486
        %v488 = vpop.f32.mrb[0].mxu0
        %v489 = vadd.f32 0.0, %v488
        %v490 = vpop.f32.mrb[0].mxu0
        %v491 = vadd.f32 0.0, %v490
        %v492 = vpop.f32.mrb[0].mxu0
        %v493 = vadd.f32 0.0, %v492
        %494 = vmatprep.mubr.bf16.mxu0 0
        %495 = vmatmul.mubr.bf16.gmra.mrb[0].mxu0 %v411
        %v496 = vpop.f32.mrb[0].mxu0
        %v497 = vadd.f32 0.0, %v496
        %v498 = vpop.f32.mrb[0].mxu0
        %v499 = vadd.f32 0.0, %v498
        %v500 = vpop.f32.mrb[0].mxu0
        %v501 = vadd.f32 0.0, %v500
        %v502 = vpop.f32.mrb[0].mxu0
        %v503 = vadd.f32 0.0, %v502
        %504 = vmatprep.mubr.bf16.mxu0 0
        %505 = vmatmul.mubr.bf16.gmra.mrb[0].mxu0 %v414
        %v506 = vpop.f32.mrb[0].mxu0
        %v507 = vadd.f32 0.0, %v506
        %v508 = vpop.f32.mrb[0].mxu0
        %v509 = vadd.f32 0.0, %v508
        %v510 = vpop.f32.mrb[0].mxu0
        %v511 = vadd.f32 0.0, %v510
        %v512 = vpop.f32.mrb[0].mxu0
        %v513 = vadd.f32 0.0, %v512
        %514 = vmatprep.mubr.bf16.mxu0 0
        %515 = vmatmul.mubr.bf16.gmra.mrb[0].mxu0 %v417
        %v516 = vpop.f32.mrb[0].mxu0
        %v517 = vadd.f32 0.0, %v516
        %v518 = vpop.f32.mrb[0].mxu0
        %v519 = vadd.f32 0.0, %v518
        %v520 = vpop.f32.mrb[0].mxu0
        %v521 = vadd.f32 0.0, %v520
        %v522 = vpop.f32.mrb[0].mxu0
        %v523 = vadd.f32 0.0, %v522
        %524 = vmatprep.mubr.bf16.mxu0 0
        %525 = vmatmul.mubr.bf16.gmra.mrb[0].mxu0 %v420
        %v526 = vpop.f32.mrb[0].mxu0
        %v527 = vadd.f32 0.0, %v526
        %v528 = vpop.f32.mrb[0].mxu0
        %v529 = vadd.f32 0.0, %v528
        %v530 = vpop.f32.mrb[0].mxu0
        %v531 = vadd.f32 0.0, %v530
        %v532 = vpop.f32.mrb[0].mxu0
        %v533 = vadd.f32 0.0, %v532
        %534 = vmatprep.mubr.bf16.mxu0 0
        %535 = vmatmul.mubr.bf16.gmra.mrb[0].mxu0 %v423
        %v536 = vpop.f32.mrb[0].mxu0
        %v537 = vadd.f32 0.0, %v536
        %v538 = vpop.f32.mrb[0].mxu0
        %v539 = vadd.f32 0.0, %v538
        %v540 = vpop.f32.mrb[0].mxu0
        %v541 = vadd.f32 0.0, %v540
        %v542 = vpop.f32.mrb[0].mxu0
        %v543 = vadd.f32 0.0, %v542
        %544 = vdwg.mxu0
        %v547 = vunpack.c.l.b16 %v392
        %v548 = vunpack.c.h.b16 %v392
        %v549 = vunpack.c.l.b16 %v393
        %v550 = vunpack.c.h.b16 %v393
        %v551 = vpack.c.b16 %v549, %v547
        %v552 = vpack.c.b16 %v550, %v548
        %vm555 = vcmask 130048
        %v557 = vsel %vm555, %v360, 0
        %v560 = vsel %vm555, %v361, 0
        %v563 = vsel %vm555, %v362, 0
        %v566 = vsel %vm555, %v363, 0
        %v569 = vsel %vm555, %v364, 0
        %v572 = vsel %vm555, %v365, 0
        %v575 = vsel %vm555, %v366, 0
        %v578 = vsel %vm555, %v367, 0
        %580 = vmatprep.subr.bf16.mxu0 %v552
        %581 = vmatpush1.bf16.msra.mxu0 %v551
        %582 = vmatprep.subr.bf16.mxu0 0
        %583 = vmatpush1.bf16.msra.mxu0 0
        %584 = vmatprep.subr.bf16.mxu0 0
        %585 = vmatpush1.bf16.msra.mxu0 0
        %586 = vmatprep.subr.bf16.mxu0 0
        %587 = vmatpush1.bf16.msra.mxu0 0
        %588 = vmatprep.subr.bf16.mxu0 0
        %589 = vmatpush1.bf16.msra.mxu0 0
        %590 = vmatprep.subr.bf16.mxu0 0
        %591 = vmatpush1.bf16.msra.mxu0 0
        %592 = vmatprep.subr.bf16.mxu0 0
        %593 = vmatpush1.bf16.msra.mxu0 0
        %594 = vmatprep.subr.bf16.mxu0 0
        %595 = vmatpush1.bf16.msra.mxu0 0
        %596 = vmatprep.subr.bf16.mxu0 0
        %597 = vmatpush1.bf16.msra.mxu0 0
        %598 = vmatprep.subr.bf16.mxu0 0
        %599 = vmatpush1.bf16.msra.mxu0 0
        %600 = vmatprep.subr.bf16.mxu0 0
        %601 = vmatpush1.bf16.msra.mxu0 0
        %602 = vmatprep.subr.bf16.mxu0 0
        %603 = vmatpush1.bf16.msra.mxu0 0
        %604 = vmatprep.subr.bf16.mxu0 0
        %605 = vmatpush1.bf16.msra.mxu0 0
        %606 = vmatprep.subr.bf16.mxu0 0
        %607 = vmatpush1.bf16.msra.mxu0 0
        %608 = vmatprep.subr.bf16.mxu0 0
        %609 = vmatpush1.bf16.msra.mxu0 0
        %610 = vmatprep.subr.bf16.mxu0 0
        %611 = vmatpush1.bf16.msra.mxu0 0
        %612 = vmatprep.mubr.bf16.mxu0 0
        %613 = vmatmul.mubr.bf16.gmra.mrb[0].mxu0 %v557
        %v614 = vpop.f32.mrb[0].mxu0
        %v615 = vadd.f32 %v467, %v614
        %v616 = vpop.f32.mrb[0].mxu0
        %v617 = vadd.f32 %v469, %v616
        %v618 = vpop.f32.mrb[0].mxu0
        %v619 = vadd.f32 %v471, %v618
        %v620 = vpop.f32.mrb[0].mxu0
        %v621 = vadd.f32 %v473, %v620
        %622 = vmatprep.mubr.bf16.mxu0 0
        %623 = vmatmul.mubr.bf16.gmra.mrb[0].mxu0 %v560
        %v624 = vpop.f32.mrb[0].mxu0
        %v625 = vadd.f32 %v477, %v624
        %v626 = vpop.f32.mrb[0].mxu0
        %v627 = vadd.f32 %v479, %v626
        %v628 = vpop.f32.mrb[0].mxu0
        %v629 = vadd.f32 %v481, %v628
        %v630 = vpop.f32.mrb[0].mxu0
        %v631 = vadd.f32 %v483, %v630
        %632 = vmatprep.mubr.bf16.mxu0 0
        %633 = vmatmul.mubr.bf16.gmra.mrb[0].mxu0 %v563
        %v634 = vpop.f32.mrb[0].mxu0
        %v635 = vadd.f32 %v487, %v634
        %v636 = vpop.f32.mrb[0].mxu0
        %v637 = vadd.f32 %v489, %v636
        %v638 = vpop.f32.mrb[0].mxu0
        %v639 = vadd.f32 %v491, %v638
        %v640 = vpop.f32.mrb[0].mxu0
        %v641 = vadd.f32 %v493, %v640
        %642 = vmatprep.mubr.bf16.mxu0 0
        %643 = vmatmul.mubr.bf16.gmra.mrb[0].mxu0 %v566
        %v644 = vpop.f32.mrb[0].mxu0
        %v645 = vadd.f32 %v497, %v644
        %v646 = vpop.f32.mrb[0].mxu0
        %v647 = vadd.f32 %v499, %v646
        %v648 = vpop.f32.mrb[0].mxu0
        %v649 = vadd.f32 %v501, %v648
        %v650 = vpop.f32.mrb[0].mxu0
        %v651 = vadd.f32 %v503, %v650
        %652 = vmatprep.mubr.bf16.mxu0 0
        %653 = vmatmul.mubr.bf16.gmra.mrb[0].mxu0 %v569
        %v654 = vpop.f32.mrb[0].mxu0
        %v655 = vadd.f32 %v507, %v654
        %v656 = vpop.f32.mrb[0].mxu0
        %v657 = vadd.f32 %v509, %v656
        %v658 = vpop.f32.mrb[0].mxu0
        %v659 = vadd.f32 %v511, %v658
        %v660 = vpop.f32.mrb[0].mxu0
        %v661 = vadd.f32 %v513, %v660
        %662 = vmatprep.mubr.bf16.mxu0 0
        %663 = vmatmul.mubr.bf16.gmra.mrb[0].mxu0 %v572
        %v664 = vpop.f32.mrb[0].mxu0
        %v665 = vadd.f32 %v517, %v664
        %v666 = vpop.f32.mrb[0].mxu0
        %v667 = vadd.f32 %v519, %v666
        %v668 = vpop.f32.mrb[0].mxu0
        %v669 = vadd.f32 %v521, %v668
        %v670 = vpop.f32.mrb[0].mxu0
        %v671 = vadd.f32 %v523, %v670
        %672 = vmatprep.mubr.bf16.mxu0 0
        %673 = vmatmul.mubr.bf16.gmra.mrb[0].mxu0 %v575
        %v674 = vpop.f32.mrb[0].mxu0
        %v675 = vadd.f32 %v527, %v674
        %v676 = vpop.f32.mrb[0].mxu0
        %v677 = vadd.f32 %v529, %v676
        %v678 = vpop.f32.mrb[0].mxu0
        %v679 = vadd.f32 %v531, %v678
        %v680 = vpop.f32.mrb[0].mxu0
        %v681 = vadd.f32 %v533, %v680
        %682 = vmatprep.mubr.bf16.mxu0 0
        %683 = vmatmul.mubr.bf16.gmra.mrb[0].mxu0 %v578
        %v684 = vpop.f32.mrb[0].mxu0
        %v685 = vadd.f32 %v537, %v684
        %v686 = vpop.f32.mrb[0].mxu0
        %v687 = vadd.f32 %v539, %v686
        %v688 = vpop.f32.mrb[0].mxu0
        %v689 = vadd.f32 %v541, %v688
        %v690 = vpop.f32.mrb[0].mxu0
        %v691 = vadd.f32 %v543, %v690
        %692 = vdwg.mxu0
        %v694 = vlaneseq
        %v695 = vshrl.u32 %v694, 7
        %v696 = vsub.s32 0, %v695
        %v697 = vrot.slane %v342, %v696
        %v698 = vlaneseq
        %v699 = vshrl.u32 %v698, 7
        %v700 = vsub.s32 4, %v699
        %v701 = vrot.slane %v342, %v700
        %v704 = vlaneseq
        %v705 = vshrl.u32 %v704, 7
        %v706 = vsub.s32 0, %v705
        %v707 = vrot.slane %v697, %v706
        %v708 = vlaneseq
        %v709 = vshrl.u32 %v708, 7
        %v710 = vsub.s32 0, %v709
        %v711 = vrot.slane %v701, %v710
        %v712 = vadd.f32 %v615, %v707
        %v713 = vadd.f32 %v617, %v711
        %v714 = vadd.f32 %v619, %v707
        %v715 = vadd.f32 %v621, %v711
        %v716 = vadd.f32 %v625, %v707
        %v717 = vadd.f32 %v627, %v711
        %v718 = vadd.f32 %v629, %v707
        %v719 = vadd.f32 %v631, %v711
        %v720 = vadd.f32 %v635, %v707
        %v721 = vadd.f32 %v637, %v711
        %v722 = vadd.f32 %v639, %v707
        %v723 = vadd.f32 %v641, %v711
        %v724 = vadd.f32 %v645, %v707
        %v725 = vadd.f32 %v647, %v711
        %v726 = vadd.f32 %v649, %v707
        %v727 = vadd.f32 %v651, %v711
        %v728 = vadd.f32 %v655, %v707
        %v729 = vadd.f32 %v657, %v711
        %v730 = vadd.f32 %v659, %v707
        %v731 = vadd.f32 %v661, %v711
        %v732 = vadd.f32 %v665, %v707
        %v733 = vadd.f32 %v667, %v711
        %v734 = vadd.f32 %v669, %v707
        %v735 = vadd.f32 %v671, %v711
        %v736 = vadd.f32 %v675, %v707
        %v737 = vadd.f32 %v677, %v711
        %v738 = vadd.f32 %v679, %v707
        %v739 = vadd.f32 %v681, %v711
        %v740 = vadd.f32 %v685, %v707
        %v741 = vadd.f32 %v687, %v711
        %v742 = vadd.f32 %v689, %v707
        %v743 = vadd.f32 %v691, %v711
        %v744 = vmax.f32 %v712, 0.0
        %v745 = vmax.f32 %v713, 0.0
        %v746 = vmax.f32 %v714, 0.0
        %v747 = vmax.f32 %v715, 0.0
        %v748 = vmax.f32 %v716, 0.0
        %v749 = vmax.f32 %v717, 0.0
        %v750 = vmax.f32 %v718, 0.0
        %v751 = vmax.f32 %v719, 0.0
        %v752 = vmax.f32 %v720, 0.0
        %v753 = vmax.f32 %v721, 0.0
        %v754 = vmax.f32 %v722, 0.0
        %v755 = vmax.f32 %v723, 0.0
        %v756 = vmax.f32 %v724, 0.0
        %v757 = vmax.f32 %v725, 0.0
        %v758 = vmax.f32 %v726, 0.0
        %v759 = vmax.f32 %v727, 0.0
        %v760 = vmax.f32 %v728, 0.0
        %v761 = vmax.f32 %v729, 0.0
        %v762 = vmax.f32 %v730, 0.0
        %v763 = vmax.f32 %v731, 0.0
        %v764 = vmax.f32 %v732, 0.0
        %v765 = vmax.f32 %v733, 0.0
        %v766 = vmax.f32 %v734, 0.0
        %v767 = vmax.f32 %v735, 0.0
        %v768 = vmax.f32 %v736, 0.0
        %v769 = vmax.f32 %v737, 0.0
        %v770 = vmax.f32 %v738, 0.0
        %v771 = vmax.f32 %v739, 0.0
        %v772 = vmax.f32 %v740, 0.0
        %v773 = vmax.f32 %v741, 0.0
        %v774 = vmax.f32 %v742, 0.0
        %v775 = vmax.f32 %v743, 0.0
        %v776 = vpack.c.bf16 %v746, %v744
        %v777 = vpack.c.bf16 %v747, %v745
        %v778 = vpack.c.bf16 %v750, %v748
        %v779 = vpack.c.bf16 %v751, %v749
        %v780 = vpack.c.bf16 %v754, %v752
        %v781 = vpack.c.bf16 %v755, %v753
        %v782 = vpack.c.bf16 %v758, %v756
        %v783 = vpack.c.bf16 %v759, %v757
        %v784 = vpack.c.bf16 %v762, %v760
        %v785 = vpack.c.bf16 %v763, %v761
        %v786 = vpack.c.bf16 %v766, %v764
        %v787 = vpack.c.bf16 %v767, %v765
        %v788 = vpack.c.bf16 %v770, %v768
        %v789 = vpack.c.bf16 %v771, %v769
        %v790 = vpack.c.bf16 %v774, %v772
        %v791 = vpack.c.bf16 %v775, %v773
        %v792 = vld [vmem:[%s4] sm:$0xff]
        %v793 = vld [vmem:[%s4 + $0x8] sm:$0xff]
        %v794 = vld [vmem:[%s4 + $0x10] sm:$0xff]
        %v795 = vld [vmem:[%s4 + $0x18] sm:$0xff]
        %v796 = vld [vmem:[%s4 + $0x20] sm:$0xff]
        %v797 = vld [vmem:[%s4 + $0x28] sm:$0xff]
        %v798 = vld [vmem:[%s4 + $0x30] sm:$0xff]
        %v799 = vld [vmem:[%s4 + $0x38] sm:$0xff]
        %v800 = vld [vmem:[%s4 + $0x40] sm:$0xff]
        %v801 = vld [vmem:[%s4 + $0x48] sm:$0xff]
        %v802 = vld [vmem:[%s4 + $0x50] sm:$0xff]
        %v803 = vld [vmem:[%s4 + $0x58] sm:$0xff]
        %v804 = vld [vmem:[%s4 + $0x60] sm:$0xff]
        %v805 = vld [vmem:[%s4 + $0x68] sm:$0xff]
        %v806 = vld [vmem:[%s4 + $0x70] sm:$0xff]
        %v807 = vld [vmem:[%s4 + $0x78] sm:$0xff]
        %v808 = vld [vmem:[%s4 + $0x80] sm:$0xff]
        %v809 = vld [vmem:[%s4 + $0x88] sm:$0xff]
        %v810 = vld [vmem:[%s4 + $0x90] sm:$0xff]
        %v811 = vld [vmem:[%s4 + $0x98] sm:$0xff]
        %v812 = vld [vmem:[%s4 + $0xa0] sm:$0xff]
        %v813 = vld [vmem:[%s4 + $0xa8] sm:$0xff]
        %v814 = vld [vmem:[%s4 + $0xb0] sm:$0xff]
        %v815 = vld [vmem:[%s4 + $0xb8] sm:$0xff]
        %v816 = vld [vmem:[%s4 + $0xc0] sm:$0xff]
        %v817 = vld [vmem:[%s4 + $0xc8] sm:$0xff]
        %v818 = vld [vmem:[%s4 + $0xd0] sm:$0xff]
        %v819 = vld [vmem:[%s4 + $0xd8] sm:$0xff]
        %v820 = vld [vmem:[%s4 + $0xe0] sm:$0xff]
        %v821 = vld [vmem:[%s4 + $0xe8] sm:$0xff]
        %v822 = vld [vmem:[%s4 + $0xf0] sm:$0xff]
        %v823 = vld [vmem:[%s4 + $0xf8] sm:$0xff]
        %v824 = vlaneseq
        %v825 = vshrl.u32 %v824, 7
        %v826 = vsub.s32 1, %v825
        %v827 = vrot.slane %v342, %v826
        %v828 = vlaneseq
        %v829 = vshrl.u32 %v828, 7
        %v830 = vsub.s32 5, %v829
        %v831 = vrot.slane %v342, %v830
        %v834 = vlaneseq
        %v835 = vshrl.u32 %v834, 7
        %v836 = vsub.s32 1, %v835
        %v837 = vrot.slane %v827, %v836
        %v838 = vlaneseq
        %v839 = vshrl.u32 %v838, 7
        %v840 = vsub.s32 1, %v839
        %v841 = vrot.slane %v831, %v840
        %v874 = vunpack.c.l.b16 %v792
        %v875 = vunpack.c.h.b16 %v792
        %v876 = vunpack.c.l.b16 %v793
        %v877 = vunpack.c.h.b16 %v793
        %v878 = vunpack.c.l.b16 %v794
        %v879 = vunpack.c.h.b16 %v794
        %v880 = vunpack.c.l.b16 %v795
        %v881 = vunpack.c.h.b16 %v795
        %v882 = vunpack.c.l.b16 %v796
        %v883 = vunpack.c.h.b16 %v796
        %v884 = vunpack.c.l.b16 %v797
        %v885 = vunpack.c.h.b16 %v797
        %v886 = vunpack.c.l.b16 %v798
        %v887 = vunpack.c.h.b16 %v798
        %v888 = vunpack.c.l.b16 %v799
        %v889 = vunpack.c.h.b16 %v799
        %v890 = vunpack.c.l.b16 %v800
        %v891 = vunpack.c.h.b16 %v800
        %v892 = vunpack.c.l.b16 %v801
        %v893 = vunpack.c.h.b16 %v801
        %v894 = vunpack.c.l.b16 %v802
        %v895 = vunpack.c.h.b16 %v802
        %v896 = vunpack.c.l.b16 %v803
        %v897 = vunpack.c.h.b16 %v803
        %v898 = vunpack.c.l.b16 %v804
        %v899 = vunpack.c.h.b16 %v804
        %v900 = vunpack.c.l.b16 %v805
        %v901 = vunpack.c.h.b16 %v805
        %v902 = vunpack.c.l.b16 %v806
        %v903 = vunpack.c.h.b16 %v806
        %v904 = vunpack.c.l.b16 %v807
        %v905 = vunpack.c.h.b16 %v807
        %v906 = vunpack.c.l.b16 %v808
        %v907 = vunpack.c.h.b16 %v808
        %v908 = vunpack.c.l.b16 %v809
        %v909 = vunpack.c.h.b16 %v809
        %v910 = vunpack.c.l.b16 %v810
        %v911 = vunpack.c.h.b16 %v810
        %v912 = vunpack.c.l.b16 %v811
        %v913 = vunpack.c.h.b16 %v811
        %v914 = vunpack.c.l.b16 %v812
        %v915 = vunpack.c.h.b16 %v812
        %v916 = vunpack.c.l.b16 %v813
        %v917 = vunpack.c.h.b16 %v813
        %v918 = vunpack.c.l.b16 %v814
        %v919 = vunpack.c.h.b16 %v814
        %v920 = vunpack.c.l.b16 %v815
        %v921 = vunpack.c.h.b16 %v815
        %v922 = vunpack.c.l.b16 %v816
        %v923 = vunpack.c.h.b16 %v816
        %v924 = vunpack.c.l.b16 %v817
        %v925 = vunpack.c.h.b16 %v817
        %v926 = vunpack.c.l.b16 %v818
        %v927 = vunpack.c.h.b16 %v818
        %v928 = vunpack.c.l.b16 %v819
        %v929 = vunpack.c.h.b16 %v819
        %v930 = vunpack.c.l.b16 %v820
        %v931 = vunpack.c.h.b16 %v820
        %v932 = vunpack.c.l.b16 %v821
        %v933 = vunpack.c.h.b16 %v821
        %v934 = vunpack.c.l.b16 %v822
        %v935 = vunpack.c.h.b16 %v822
        %v936 = vunpack.c.l.b16 %v823
        %v937 = vunpack.c.h.b16 %v823
        %v938 = vpack.c.b16 %v876, %v874
        %v939 = vpack.c.b16 %v877, %v875
        %v940 = vpack.c.b16 %v880, %v878
        %v941 = vpack.c.b16 %v881, %v879
        %v942 = vpack.c.b16 %v884, %v882
        %v943 = vpack.c.b16 %v885, %v883
        %v944 = vpack.c.b16 %v888, %v886
        %v945 = vpack.c.b16 %v889, %v887
        %v946 = vpack.c.b16 %v892, %v890
        %v947 = vpack.c.b16 %v893, %v891
        %v948 = vpack.c.b16 %v896, %v894
        %v949 = vpack.c.b16 %v897, %v895
        %v950 = vpack.c.b16 %v900, %v898
        %v951 = vpack.c.b16 %v901, %v899
        %v952 = vpack.c.b16 %v904, %v902
        %v953 = vpack.c.b16 %v905, %v903
        %v954 = vpack.c.b16 %v908, %v906
        %v955 = vpack.c.b16 %v909, %v907
        %v956 = vpack.c.b16 %v912, %v910
        %v957 = vpack.c.b16 %v913, %v911
        %v958 = vpack.c.b16 %v916, %v914
        %v959 = vpack.c.b16 %v917, %v915
        %v960 = vpack.c.b16 %v920, %v918
        %v961 = vpack.c.b16 %v921, %v919
        %v962 = vpack.c.b16 %v924, %v922
        %v963 = vpack.c.b16 %v925, %v923
        %v964 = vpack.c.b16 %v928, %v926
        %v965 = vpack.c.b16 %v929, %v927
        %v966 = vpack.c.b16 %v932, %v930
        %v967 = vpack.c.b16 %v933, %v931
        %v968 = vpack.c.b16 %v936, %v934
        %v969 = vpack.c.b16 %v937, %v935
        %1002 = vmatprep.subr.bf16.mxu0 %v939
        %1003 = vmatpush1.bf16.msra.mxu0 %v938
        %1004 = vmatprep.subr.bf16.mxu0 %v941
        %1005 = vmatpush1.bf16.msra.mxu0 %v940
        %1006 = vmatprep.subr.bf16.mxu0 %v943
        %1007 = vmatpush1.bf16.msra.mxu0 %v942
        %1008 = vmatprep.subr.bf16.mxu0 %v945
        %1009 = vmatpush1.bf16.msra.mxu0 %v944
        %1010 = vmatprep.subr.bf16.mxu0 %v947
        %1011 = vmatpush1.bf16.msra.mxu0 %v946
        %1012 = vmatprep.subr.bf16.mxu0 %v949
        %1013 = vmatpush1.bf16.msra.mxu0 %v948
        %1014 = vmatprep.subr.bf16.mxu0 %v951
        %1015 = vmatpush1.bf16.msra.mxu0 %v950
        %1016 = vmatprep.subr.bf16.mxu0 %v953
        %1017 = vmatpush1.bf16.msra.mxu0 %v952
        %1018 = vmatprep.subr.bf16.mxu0 %v955
        %1019 = vmatpush1.bf16.msra.mxu0 %v954
        %1020 = vmatprep.subr.bf16.mxu0 %v957
        %1021 = vmatpush1.bf16.msra.mxu0 %v956
        %1022 = vmatprep.subr.bf16.mxu0 %v959
        %1023 = vmatpush1.bf16.msra.mxu0 %v958
        %1024 = vmatprep.subr.bf16.mxu0 %v961
        %1025 = vmatpush1.bf16.msra.mxu0 %v960
        %1026 = vmatprep.subr.bf16.mxu0 %v963
        %1027 = vmatpush1.bf16.msra.mxu0 %v962
        %1028 = vmatprep.subr.bf16.mxu0 %v965
        %1029 = vmatpush1.bf16.msra.mxu0 %v964
        %1030 = vmatprep.subr.bf16.mxu0 %v967
        %1031 = vmatpush1.bf16.msra.mxu0 %v966
        %1032 = vmatprep.subr.bf16.mxu0 %v969
        %1033 = vmatpush1.bf16.msra.mxu0 %v968
        %1034 = vmatprep.mubr.bf16.mxu0 %v777
        %1035 = vmatmul.mubr.bf16.gmra.mrb[0].mxu0 %v776
        %v1036 = vpop.f32.mrb[0].mxu0
        %v1037 = vadd.f32 %v837, %v1036
        %v1038 = vpop.f32.mrb[0].mxu0
        %v1039 = vadd.f32 %v841, %v1038
        %v1040 = vpop.f32.mrb[0].mxu0
        %v1041 = vadd.f32 %v837, %v1040
        %v1042 = vpop.f32.mrb[0].mxu0
        %v1043 = vadd.f32 %v841, %v1042
        %1044 = vmatprep.mubr.bf16.mxu0 %v779
        %1045 = vmatmul.mubr.bf16.gmra.mrb[0].mxu0 %v778
        %v1046 = vpop.f32.mrb[0].mxu0
        %v1047 = vadd.f32 %v837, %v1046
        %v1048 = vpop.f32.mrb[0].mxu0
        %v1049 = vadd.f32 %v841, %v1048
        %v1050 = vpop.f32.mrb[0].mxu0
        %v1051 = vadd.f32 %v837, %v1050
        %v1052 = vpop.f32.mrb[0].mxu0
        %v1053 = vadd.f32 %v841, %v1052
        %1054 = vmatprep.mubr.bf16.mxu0 %v781
        %1055 = vmatmul.mubr.bf16.gmra.mrb[0].mxu0 %v780
        %v1056 = vpop.f32.mrb[0].mxu0
        %v1057 = vadd.f32 %v837, %v1056
        %v1058 = vpop.f32.mrb[0].mxu0
        %v1059 = vadd.f32 %v841, %v1058
        %v1060 = vpop.f32.mrb[0].mxu0
        %v1061 = vadd.f32 %v837, %v1060
        %v1062 = vpop.f32.mrb[0].mxu0
        %v1063 = vadd.f32 %v841, %v1062
        %1064 = vmatprep.mubr.bf16.mxu0 %v783
        %1065 = vmatmul.mubr.bf16.gmra.mrb[0].mxu0 %v782
        %v1066 = vpop.f32.mrb[0].mxu0
        %v1067 = vadd.f32 %v837, %v1066
        %v1068 = vpop.f32.mrb[0].mxu0
        %v1069 = vadd.f32 %v841, %v1068
        %v1070 = vpop.f32.mrb[0].mxu0
        %v1071 = vadd.f32 %v837, %v1070
        %v1072 = vpop.f32.mrb[0].mxu0
        %v1073 = vadd.f32 %v841, %v1072
        %1074 = vmatprep.mubr.bf16.mxu0 %v785
        %1075 = vmatmul.mubr.bf16.gmra.mrb[0].mxu0 %v784
        %v1076 = vpop.f32.mrb[0].mxu0
        %v1077 = vadd.f32 %v837, %v1076
        %v1078 = vpop.f32.mrb[0].mxu0
        %v1079 = vadd.f32 %v841, %v1078
        %v1080 = vpop.f32.mrb[0].mxu0
        %v1081 = vadd.f32 %v837, %v1080
        %v1082 = vpop.f32.mrb[0].mxu0
        %v1083 = vadd.f32 %v841, %v1082
        %1084 = vmatprep.mubr.bf16.mxu0 %v787
        %1085 = vmatmul.mubr.bf16.gmra.mrb[0].mxu0 %v786
        %v1086 = vpop.f32.mrb[0].mxu0
        %v1087 = vadd.f32 %v837, %v1086
        %v1088 = vpop.f32.mrb[0].mxu0
        %v1089 = vadd.f32 %v841, %v1088
        %v1090 = vpop.f32.mrb[0].mxu0
        %v1091 = vadd.f32 %v837, %v1090
        %v1092 = vpop.f32.mrb[0].mxu0
        %v1093 = vadd.f32 %v841, %v1092
        %1094 = vmatprep.mubr.bf16.mxu0 %v789
        %1095 = vmatmul.mubr.bf16.gmra.mrb[0].mxu0 %v788
        %v1096 = vpop.f32.mrb[0].mxu0
        %v1097 = vadd.f32 %v837, %v1096
        %v1098 = vpop.f32.mrb[0].mxu0
        %v1099 = vadd.f32 %v841, %v1098
        %v1100 = vpop.f32.mrb[0].mxu0
        %v1101 = vadd.f32 %v837, %v1100
        %v1102 = vpop.f32.mrb[0].mxu0
        %v1103 = vadd.f32 %v841, %v1102
        %1104 = vmatprep.mubr.bf16.mxu0 %v791
        %1105 = vmatmul.mubr.bf16.gmra.mrb[0].mxu0 %v790
        %v1106 = vpop.f32.mrb[0].mxu0
        %v1107 = vadd.f32 %v837, %v1106
        %v1108 = vpop.f32.mrb[0].mxu0
        %v1109 = vadd.f32 %v841, %v1108
        %v1110 = vpop.f32.mrb[0].mxu0
        %v1111 = vadd.f32 %v837, %v1110
        %v1112 = vpop.f32.mrb[0].mxu0
        %v1113 = vadd.f32 %v841, %v1112
        %1114 = vdwg.mxu0
        %v1115 = vmax.f32 %v1037, 0.0
        %v1116 = vmax.f32 %v1039, 0.0
        %v1117 = vmax.f32 %v1041, 0.0
        %v1118 = vmax.f32 %v1043, 0.0
        %v1119 = vmax.f32 %v1047, 0.0
        %v1120 = vmax.f32 %v1049, 0.0
        %v1121 = vmax.f32 %v1051, 0.0
        %v1122 = vmax.f32 %v1053, 0.0
        %v1123 = vmax.f32 %v1057, 0.0
        %v1124 = vmax.f32 %v1059, 0.0
        %v1125 = vmax.f32 %v1061, 0.0
        %v1126 = vmax.f32 %v1063, 0.0
        %v1127 = vmax.f32 %v1067, 0.0
        %v1128 = vmax.f32 %v1069, 0.0
        %v1129 = vmax.f32 %v1071, 0.0
        %v1130 = vmax.f32 %v1073, 0.0
        %v1131 = vmax.f32 %v1077, 0.0
        %v1132 = vmax.f32 %v1079, 0.0
        %v1133 = vmax.f32 %v1081, 0.0
        %v1134 = vmax.f32 %v1083, 0.0
        %v1135 = vmax.f32 %v1087, 0.0
        %v1136 = vmax.f32 %v1089, 0.0
        %v1137 = vmax.f32 %v1091, 0.0
        %v1138 = vmax.f32 %v1093, 0.0
        %v1139 = vmax.f32 %v1097, 0.0
        %v1140 = vmax.f32 %v1099, 0.0
        %v1141 = vmax.f32 %v1101, 0.0
        %v1142 = vmax.f32 %v1103, 0.0
        %v1143 = vmax.f32 %v1107, 0.0
        %v1144 = vmax.f32 %v1109, 0.0
        %v1145 = vmax.f32 %v1111, 0.0
        %v1146 = vmax.f32 %v1113, 0.0
        %v1147 = vstv %s343
        %v1148 = vlaneseq
        %v1149 = vshrl.u32 %v1148, 7
        %v1150 = vsub.s32 2, %v1149
        %v1151 = vrot.slane %v342, %v1150
        %v1152 = vlaneseq
        %v1153 = vshrl.u32 %v1152, 7
        %v1154 = vsub.s32 6, %v1153
        %v1155 = vrot.slane %v342, %v1154
        %1158 = vmatprep.subr.mxu0 %v1116
        %1159 = vmatpush1.xpose.msra.mxu0 %v1115
        %1160 = vmatprep.subr.mxu0 %v1118
        %1161 = vmatpush1.xpose.msra.mxu0 %v1117
        %1162 = vmatprep.subr.mxu0 %v1120
        %1163 = vmatpush1.xpose.msra.mxu0 %v1119
        %1164 = vmatprep.subr.mxu0 %v1122
        %1165 = vmatpush1.xpose.msra.mxu0 %v1121
        %1166 = vmatprep.subr.mxu0 %v1124
        %1167 = vmatpush1.xpose.msra.mxu0 %v1123
        %1168 = vmatprep.subr.mxu0 %v1126
        %1169 = vmatpush1.xpose.msra.mxu0 %v1125
        %1170 = vmatprep.subr.mxu0 %v1128
        %1171 = vmatpush1.xpose.msra.mxu0 %v1127
        %1172 = vmatprep.subr.mxu0 %v1130
        %1173 = vmatpush1.xpose.msra.mxu0 %v1129
        %1174 = vmatprep.subr.mxu0 %v1132
        %1175 = vmatpush1.xpose.msra.mxu0 %v1131
        %1176 = vmatprep.subr.mxu0 %v1134
        %1177 = vmatpush1.xpose.msra.mxu0 %v1133
        %1178 = vmatprep.subr.mxu0 %v1136
        %1179 = vmatpush1.xpose.msra.mxu0 %v1135
        %1180 = vmatprep.subr.mxu0 %v1138
        %1181 = vmatpush1.xpose.msra.mxu0 %v1137
        %1182 = vmatprep.subr.mxu0 %v1140
        %1183 = vmatpush1.xpose.msra.mxu0 %v1139
        %1184 = vmatprep.subr.mxu0 %v1142
        %1185 = vmatpush1.xpose.msra.mxu0 %v1141
        %1186 = vmatprep.subr.mxu0 %v1144
        %1187 = vmatpush1.xpose.msra.mxu0 %v1143
        %1188 = vmatprep.subr.mxu0 %v1146
        %1189 = vmatpush1.xpose.msra.mxu0 %v1145
        %1190 = vmatprep.subr.mxu0 0.0
        %1191 = vmatpush1.xpose.msra.mxu0 0.0
        %1192 = vmatprep.subr.mxu0 0.0
        %1193 = vmatpush1.xpose.msra.mxu0 0.0
        %1194 = vmatprep.subr.mxu0 0.0
        %1195 = vmatpush1.xpose.msra.mxu0 0.0
        %1196 = vmatprep.subr.mxu0 0.0
        %1197 = vmatpush1.xpose.msra.mxu0 0.0
        %1198 = vmatprep.subr.mxu0 0.0
        %1199 = vmatpush1.xpose.msra.mxu0 0.0
        %1200 = vmatprep.subr.mxu0 0.0
        %1201 = vmatpush1.xpose.msra.mxu0 0.0
        %1202 = vmatprep.subr.mxu0 0.0
        %1203 = vmatpush1.xpose.msra.mxu0 0.0
        %1204 = vmatprep.subr.mxu0 0.0
        %1205 = vmatpush1.xpose.msra.mxu0 0.0
        %1206 = vmatprep.subr.mxu0 0.0
        %1207 = vmatpush1.xpose.msra.mxu0 0.0
        %1208 = vmatprep.subr.mxu0 0.0
        %1209 = vmatpush1.xpose.msra.mxu0 0.0
        %1210 = vmatprep.subr.mxu0 0.0
        %1211 = vmatpush1.xpose.msra.mxu0 0.0
        %1212 = vmatprep.subr.mxu0 0.0
        %1213 = vmatpush1.xpose.msra.mxu0 0.0
        %1214 = vmatprep.subr.mxu0 0.0
        %1215 = vmatpush1.xpose.msra.mxu0 0.0
        %1216 = vmatprep.subr.mxu0 0.0
        %1217 = vmatpush1.xpose.msra.mxu0 0.0
        %1218 = vmatprep.subr.mxu0 0.0
        %1219 = vmatpush1.xpose.msra.mxu0 0.0
        %1220 = vmatprep.subr.mxu0 0.0
        %1221 = vmatpush1.xpose.msra.mxu0 0.0
        %1222 = vmatprep.mubr.f32.mxu0 %v1155
        %1223 = vmatmul.mubr.f32.gmra.mrb[0].mxu0 %v1151
        %v1224 = vpop.f32.mrb[0].mxu0
        %v1225 = vadd.f32 %v1147, %v1224
        %v1226 = vpop.f32.mrb[0].mxu0
        %1227 = vdwg.mxu0
        %1228 = vst [vmem:[%s312] sm:$0x1] %v1225
        %s1229 = sand.u32 %s187, 1
        %s1230 = scalar_lea.sflag [#allocation4], %s1229
        %s1231 = sand.u32 %s187, 1
        %s1232 = scalar_lea.vmem [#allocation3], %s1231
        // Predicated region
        $region49: #{tpu_custom_call.1} parent=47 // pred_check
          %p1233 = pneg %p197
        $region50: #{tpu_custom_call.1} parent=47 // pred_check_branch
          %1235 = sbr.rel (%p1233) target = $region52
        $region51: #{tpu_custom_call.1} parent=47 // pred_region
          %s1237 = ssub.s32 16, 16
          %1238 = vsyncadd %s1230, %s1237
          %s1239 = smul.addr %s22, 16
          %s1240 = scalar_lea.hbm %s7, %s1239
          %s1242 = sshll.u32 %s1232, 4
          %s1243 = int_to_ptr.vmem [resolvable:$true] %s1242
          %1245 = dma.vmem_to_hbm [thread:$0]  %s1243, 16, %s1240, %s1230
        $region52: #{tpu_custom_call.1} parent=47 // pred_fallthru
          _
      $region48: #{tpu_custom_call.1} parent=5 // pred_fallthru
        _
      %p1246 = scmp.le.s32.totalorder 2, %s17
      // Predicated region
      $region53: #{tpu_custom_call.1} parent=5 // pred_check
        %p1247 = pneg %p1246
      $region54: #{tpu_custom_call.1} parent=5 // pred_check_branch
        %1249 = sbr.rel (%p1247) target = $region56
      $region55: #{tpu_custom_call.1} parent=5 // pred_region
        %s1250 = ssub.s32 %s17, 2
        // Predicated region
        $region57: #{tpu_custom_call.1} parent=55 // pred_check
          %p1251 = pneg %p203
        $region58: #{tpu_custom_call.1} parent=55 // pred_check_branch
          %1253 = sbr.rel (%p1251) target = $region60
        $region59: #{tpu_custom_call.1} parent=55 // pred_region
          %s1254 = sand.u32 %s188, 1
          %s1255 = scalar_lea.sflag [#allocation4], %s1254
          %s1256 = sand.u32 %s188, 1
          %s1257 = scalar_lea.vmem [#allocation3], %s1256
          %1258 = dma.done %s1255, 16
        $region60: #{tpu_custom_call.1} parent=55 // pred_fallthru
          _
      $region56: #{tpu_custom_call.1} parent=5 // pred_fallthru
        _
    $region6: #{tpu_custom_call.1} parent=1 // loop_footer
      %s21 = sadd.s32 1, %s17
    $region7: #{tpu_custom_call.1} parent=1 // loop_footer_branch
      %16 = sbr.rel target = $region3
    $region8: #{tpu_custom_call.1} parent=1 // loop_exit
      _
    %1259 = vsyncpa [#allocation4], 1
    %s1260 = scalar_lea.sflag [#allocation4], 1
    %1261 = vsyncpa %s1260, 1

</llo_original>
